<compile_context>
chip_gen: v7x
topology: tpu7x:2x2x1
jax: 0.10.0
libtpu: 0.0.40
codegen_flags: <defaults>
</compile_context>

<pallas_src>
import jax
import jax.numpy as jnp
from jax import lax
from jax.experimental import pallas as pl
from jax.experimental.pallas import tpu as pltpu


def rnn_tagger_kernel(x_ref, wih_ref, whh_ref, b_ref, wout_ref, bout_ref,
                      out_ref):
    T, tb, E = x_ref.shape
    H = wih_ref.shape[1]
    C = wout_ref.shape[1]

    # Loop-invariant loads: keep weights value-resident for the whole body.
    wih = wih_ref[...]            # (E, H)
    whh = whh_ref[...]            # (H, H)
    b = b_ref[...]                # (1, H)  = b_ih + b_hh
    wout = wout_ref[...]          # (H, C)
    bout = bout_ref[...]          # (1, C)

    # Hoisted input projection: one (T*tb, E) @ (E, H) matmul + bias.
    x2d = x_ref[...].reshape(T * tb, E)
    xproj = (jnp.dot(x2d, wih, preferred_element_type=jnp.float32)
             + b).reshape(T, tb, H)

    # Serial recurrence, fully unrolled (T is static).  h_0 = 0 so the first
    # step needs no h@W_hh matmul; the hidden state stays in vregs.
    h = jnp.tanh(xproj[0])                                       # (tb, H)
    hs = [h]
    for t in range(1, T):
        h = jnp.tanh(xproj[t]
                     + jnp.dot(h, whh, preferred_element_type=jnp.float32))
        hs.append(h)
    hstack = jnp.stack(hs, axis=0)                               # (T, tb, H)

    # ReLU (+ identity dropout), projection, log-softmax over the class dim.
    r = jnp.maximum(hstack, 0.0).reshape(T * tb, H)
    tag = jnp.dot(r, wout, preferred_element_type=jnp.float32) + bout  # (T*tb, C)
    m = jnp.max(tag, axis=-1, keepdims=True)
    z = tag - m
    lse = jnp.log(jnp.sum(jnp.exp(z), axis=-1, keepdims=True))
    out_ref[...] = (z - lse).reshape(T, tb, C)


def rnn_tagger_forward(sentences, w_ih, w_hh, b, w_out, b_out, *, tb=8):
    """Batched forward over independent sentences.

    sentences: (T, B, E) time-major stack of B independent sentences.
    Returns (T, B, C); slice [:, b, :] equals the unbatched module forward of
    sentence b (log_softmax over the class dim).
    """
    T, B, E = sentences.shape
    H = w_ih.shape[1]
    C = w_out.shape[1]
    assert B % tb == 0, "batch must be a multiple of the sentence tile size"

    full2d = lambda shape: pl.BlockSpec(shape, lambda i: (0, 0))

    return pl.pallas_call(
        rnn_tagger_kernel,
        out_shape=jax.ShapeDtypeStruct((T, B, C), jnp.float32),
        grid_spec=pltpu.PrefetchScalarGridSpec(
            num_scalar_prefetch=0,
            grid=(B // tb,),
            in_specs=[
                pl.BlockSpec((T, tb, E), lambda i: (0, i, 0)),   # sentences
                full2d((E, H)),                                  # W_ih (transposed)
                full2d((H, H)),                                  # W_hh (transposed)
                full2d((1, H)),                                  # b_ih + b_hh
                full2d((H, C)),                                  # W_out (transposed)
                full2d((1, C)),                                  # b_out
            ],
            out_specs=pl.BlockSpec((T, tb, C), lambda i: (0, i, 0)),
        ),
        compiler_params=pltpu.CompilerParams(
            dimension_semantics=("parallel",)),
    )(sentences, w_ih, w_hh, b, w_out, b_out)


def reference_forward(sentence, w_ih, w_hh, b, w_out, b_out):
    """Pure-JAX reference for a single (T, E) sentence."""
    T, E = sentence.shape
    H = w_ih.shape[1]

    def step(h, x_t):
        h_new = jnp.tanh(x_t @ w_ih + h @ w_hh + b[0])
        return h_new, h_new

    _, hs = lax.scan(step, jnp.zeros((H,), jnp.float32), sentence)
    r = jnp.maximum(hs, 0.0)
    tag = r @ w_out + b_out[0]
    return jax.nn.log_softmax(tag, axis=-1)


if __name__ == "__main__":
    # Shapes implied by the module: seq=8, embedding_dim=16, hidden_dim=32,
    # target_size=8.  B=16 independent sentences, tb=8 per grid step.
    T, E, H, C = 8, 16, 32, 8
    B, tb = 16, 8

    key = jax.random.PRNGKey(0)
    ks = jax.random.split(key, 7)
    k = 1.0 / jnp.sqrt(H)   # PyTorch-style uniform(-1/sqrt(H), 1/sqrt(H)) init

    sentences = jax.random.normal(ks[0], (T, B, E), dtype=jnp.float32)
    w_ih = jax.random.uniform(ks[1], (E, H), jnp.float32, -k, k)
    w_hh = jax.random.uniform(ks[2], (H, H), jnp.float32, -k, k)
    b_ih = jax.random.uniform(ks[3], (1, H), jnp.float32, -k, k)
    b_hh = jax.random.uniform(ks[4], (1, H), jnp.float32, -k, k)
    b = b_ih + b_hh
    w_out = jax.random.uniform(ks[5], (H, C), jnp.float32, -k, k)
    b_out = jax.random.uniform(ks[6], (1, C), jnp.float32, -k, k)

    out = rnn_tagger_forward(sentences, w_ih, w_hh, b, w_out, b_out, tb=tb)
    out = jax.block_until_ready(out)
    assert out.shape == (T, B, C)

    ref = jax.vmap(reference_forward,
                   in_axes=(1, None, None, None, None, None),
                   out_axes=1)(sentences, w_ih, w_hh, b, w_out, b_out)
    max_err = jnp.max(jnp.abs(out - ref))
    assert jnp.allclose(out, ref, atol=1e-5, rtol=1e-5), (
        f"max abs err {max_err}")

    print("KERNEL_OK")
</pallas_src>

<mosaic_0001>
module attributes {stable_mosaic.version = 11 : i64} {
  func.func @rnn_tagger_kernel(%arg0: i32, %arg1: memref<8x8x16xf32, #tpu.memory_space<vmem>>, %arg2: memref<16x32xf32, #tpu.memory_space<vmem>>, %arg3: memref<32x32xf32, #tpu.memory_space<vmem>>, %arg4: memref<1x32xf32, #tpu.memory_space<vmem>>, %arg5: memref<32x8xf32, #tpu.memory_space<vmem>>, %arg6: memref<1x8xf32, #tpu.memory_space<vmem>>, %arg7: memref<8x8x8xf32, #tpu.memory_space<vmem>>) attributes {dimension_semantics = [#tpu.dimension_semantics<parallel>], iteration_bounds = array<i64: 2>, scalar_prefetch = 0 : i64, scratch_operands = 0 : i64, tpu.core_type = #tpu.core_type<tc>, window_params = [{transform_indices = @transform_0, window_bounds = array<i64: 8, 8, 16>}, {pipeline_mode = #tpu.pipeline_mode<synchronous>, transform_indices = @transform_1, window_bounds = array<i64: 16, 32>}, {pipeline_mode = #tpu.pipeline_mode<synchronous>, transform_indices = @transform_2, window_bounds = array<i64: 32, 32>}, {pipeline_mode = #tpu.pipeline_mode<synchronous>, transform_indices = @transform_3, window_bounds = array<i64: 1, 32>}, {pipeline_mode = #tpu.pipeline_mode<synchronous>, transform_indices = @transform_4, window_bounds = array<i64: 32, 8>}, {pipeline_mode = #tpu.pipeline_mode<synchronous>, transform_indices = @transform_5, window_bounds = array<i64: 1, 8>}, {transform_indices = @transform_6, window_bounds = array<i64: 8, 8, 8>}]} {
    %c0 = arith.constant 0 : index
    %c0_0 = arith.constant 0 : index
    %0 = vector.load %arg2[%c0, %c0_0] : memref<16x32xf32, #tpu.memory_space<vmem>>, vector<16x32xf32>
    %c0_1 = arith.constant 0 : index
    %c0_2 = arith.constant 0 : index
    %1 = vector.load %arg3[%c0_1, %c0_2] : memref<32x32xf32, #tpu.memory_space<vmem>>, vector<32x32xf32>
    %c0_3 = arith.constant 0 : index
    %c0_4 = arith.constant 0 : index
    %2 = vector.load %arg4[%c0_3, %c0_4] : memref<1x32xf32, #tpu.memory_space<vmem>>, vector<1x32xf32>
    %c0_5 = arith.constant 0 : index
    %c0_6 = arith.constant 0 : index
    %3 = vector.load %arg5[%c0_5, %c0_6] : memref<32x8xf32, #tpu.memory_space<vmem>>, vector<32x8xf32>
    %c0_7 = arith.constant 0 : index
    %c0_8 = arith.constant 0 : index
    %4 = vector.load %arg6[%c0_7, %c0_8] : memref<1x8xf32, #tpu.memory_space<vmem>>, vector<1x8xf32>
    %c0_9 = arith.constant 0 : index
    %c0_10 = arith.constant 0 : index
    %c0_11 = arith.constant 0 : index
    %5 = vector.load %arg1[%c0_9, %c0_10, %c0_11] : memref<8x8x16xf32, #tpu.memory_space<vmem>>, vector<8x8x16xf32>
    %6 = vector.shape_cast %5 : vector<8x8x16xf32> to vector<64x16xf32>
    %cst = arith.constant dense<0.000000e+00> : vector<64x32xf32>
    %7 = tpu.matmul %6, %0, %cst {dimension_numbers = #tpu.dot_dimension_numbers<[1], [0], [0], [1], [0, 0, 1, 1], [], []>} : vector<64x16xf32>, vector<16x32xf32>, vector<64x32xf32> -> vector<64x32xf32>
    %8 = vector.broadcast %2 : vector<1x32xf32> to vector<64x32xf32>
    %9 = arith.addf %7, %8 : vector<64x32xf32>
    %10 = vector.shape_cast %9 : vector<64x32xf32> to vector<8x8x32xf32>
    %11 = vector.extract_strided_slice %10 {offsets = [0, 0, 0], sizes = [1, 8, 32], strides = [1, 1, 1]} : vector<8x8x32xf32> to vector<1x8x32xf32>
    %12 = vector.shape_cast %11 : vector<1x8x32xf32> to vector<8x32xf32>
    %13 = math.tanh %12 : vector<8x32xf32>
    %14 = vector.extract_strided_slice %10 {offsets = [1, 0, 0], sizes = [1, 8, 32], strides = [1, 1, 1]} : vector<8x8x32xf32> to vector<1x8x32xf32>
    %15 = vector.shape_cast %14 : vector<1x8x32xf32> to vector<8x32xf32>
    %cst_12 = arith.constant dense<0.000000e+00> : vector<8x32xf32>
    %16 = tpu.matmul %13, %1, %cst_12 {dimension_numbers = #tpu.dot_dimension_numbers<[1], [0], [0], [1], [0, 0, 1, 1], [], []>} : vector<8x32xf32>, vector<32x32xf32>, vector<8x32xf32> -> vector<8x32xf32>
    %17 = arith.addf %15, %16 : vector<8x32xf32>
    %18 = math.tanh %17 : vector<8x32xf32>
    %19 = vector.extract_strided_slice %10 {offsets = [2, 0, 0], sizes = [1, 8, 32], strides = [1, 1, 1]} : vector<8x8x32xf32> to vector<1x8x32xf32>
    %20 = vector.shape_cast %19 : vector<1x8x32xf32> to vector<8x32xf32>
    %cst_13 = arith.constant dense<0.000000e+00> : vector<8x32xf32>
    %21 = tpu.matmul %18, %1, %cst_13 {dimension_numbers = #tpu.dot_dimension_numbers<[1], [0], [0], [1], [0, 0, 1, 1], [], []>} : vector<8x32xf32>, vector<32x32xf32>, vector<8x32xf32> -> vector<8x32xf32>
    %22 = arith.addf %20, %21 : vector<8x32xf32>
    %23 = math.tanh %22 : vector<8x32xf32>
    %24 = vector.extract_strided_slice %10 {offsets = [3, 0, 0], sizes = [1, 8, 32], strides = [1, 1, 1]} : vector<8x8x32xf32> to vector<1x8x32xf32>
    %25 = vector.shape_cast %24 : vector<1x8x32xf32> to vector<8x32xf32>
    %cst_14 = arith.constant dense<0.000000e+00> : vector<8x32xf32>
    %26 = tpu.matmul %23, %1, %cst_14 {dimension_numbers = #tpu.dot_dimension_numbers<[1], [0], [0], [1], [0, 0, 1, 1], [], []>} : vector<8x32xf32>, vector<32x32xf32>, vector<8x32xf32> -> vector<8x32xf32>
    %27 = arith.addf %25, %26 : vector<8x32xf32>
    %28 = math.tanh %27 : vector<8x32xf32>
    %29 = vector.extract_strided_slice %10 {offsets = [4, 0, 0], sizes = [1, 8, 32], strides = [1, 1, 1]} : vector<8x8x32xf32> to vector<1x8x32xf32>
    %30 = vector.shape_cast %29 : vector<1x8x32xf32> to vector<8x32xf32>
    %cst_15 = arith.constant dense<0.000000e+00> : vector<8x32xf32>
    %31 = tpu.matmul %28, %1, %cst_15 {dimension_numbers = #tpu.dot_dimension_numbers<[1], [0], [0], [1], [0, 0, 1, 1], [], []>} : vector<8x32xf32>, vector<32x32xf32>, vector<8x32xf32> -> vector<8x32xf32>
    %32 = arith.addf %30, %31 : vector<8x32xf32>
    %33 = math.tanh %32 : vector<8x32xf32>
    %34 = vector.extract_strided_slice %10 {offsets = [5, 0, 0], sizes = [1, 8, 32], strides = [1, 1, 1]} : vector<8x8x32xf32> to vector<1x8x32xf32>
    %35 = vector.shape_cast %34 : vector<1x8x32xf32> to vector<8x32xf32>
    %cst_16 = arith.constant dense<0.000000e+00> : vector<8x32xf32>
    %36 = tpu.matmul %33, %1, %cst_16 {dimension_numbers = #tpu.dot_dimension_numbers<[1], [0], [0], [1], [0, 0, 1, 1], [], []>} : vector<8x32xf32>, vector<32x32xf32>, vector<8x32xf32> -> vector<8x32xf32>
    %37 = arith.addf %35, %36 : vector<8x32xf32>
    %38 = math.tanh %37 : vector<8x32xf32>
    %39 = vector.extract_strided_slice %10 {offsets = [6, 0, 0], sizes = [1, 8, 32], strides = [1, 1, 1]} : vector<8x8x32xf32> to vector<1x8x32xf32>
    %40 = vector.shape_cast %39 : vector<1x8x32xf32> to vector<8x32xf32>
    %cst_17 = arith.constant dense<0.000000e+00> : vector<8x32xf32>
    %41 = tpu.matmul %38, %1, %cst_17 {dimension_numbers = #tpu.dot_dimension_numbers<[1], [0], [0], [1], [0, 0, 1, 1], [], []>} : vector<8x32xf32>, vector<32x32xf32>, vector<8x32xf32> -> vector<8x32xf32>
    %42 = arith.addf %40, %41 : vector<8x32xf32>
    %43 = math.tanh %42 : vector<8x32xf32>
    %44 = vector.extract_strided_slice %10 {offsets = [7, 0, 0], sizes = [1, 8, 32], strides = [1, 1, 1]} : vector<8x8x32xf32> to vector<1x8x32xf32>
    %45 = vector.shape_cast %44 : vector<1x8x32xf32> to vector<8x32xf32>
    %cst_18 = arith.constant dense<0.000000e+00> : vector<8x32xf32>
    %46 = tpu.matmul %43, %1, %cst_18 {dimension_numbers = #tpu.dot_dimension_numbers<[1], [0], [0], [1], [0, 0, 1, 1], [], []>} : vector<8x32xf32>, vector<32x32xf32>, vector<8x32xf32> -> vector<8x32xf32>
    %47 = arith.addf %45, %46 : vector<8x32xf32>
    %48 = math.tanh %47 : vector<8x32xf32>
    %49 = vector.shape_cast %13 : vector<8x32xf32> to vector<1x8x32xf32>
    %50 = vector.shape_cast %18 : vector<8x32xf32> to vector<1x8x32xf32>
    %51 = vector.shape_cast %23 : vector<8x32xf32> to vector<1x8x32xf32>
    %52 = vector.shape_cast %28 : vector<8x32xf32> to vector<1x8x32xf32>
    %53 = vector.shape_cast %33 : vector<8x32xf32> to vector<1x8x32xf32>
    %54 = vector.shape_cast %38 : vector<8x32xf32> to vector<1x8x32xf32>
    %55 = vector.shape_cast %43 : vector<8x32xf32> to vector<1x8x32xf32>
    %56 = vector.shape_cast %48 : vector<8x32xf32> to vector<1x8x32xf32>
    %57 = tpu.concatenate %49, %50, %51, %52, %53, %54, %55, %56 in 0 : vector<1x8x32xf32>, vector<1x8x32xf32>, vector<1x8x32xf32>, vector<1x8x32xf32>, vector<1x8x32xf32>, vector<1x8x32xf32>, vector<1x8x32xf32>, vector<1x8x32xf32> -> vector<8x8x32xf32>
    %cst_19 = arith.constant 0.000000e+00 : f32
    %58 = vector.broadcast %cst_19 : f32 to vector<8x8x32xf32>
    %59 = arith.maximumf %57, %58 : vector<8x8x32xf32>
    %60 = vector.shape_cast %59 : vector<8x8x32xf32> to vector<64x32xf32>
    %cst_20 = arith.constant dense<0.000000e+00> : vector<64x8xf32>
    %61 = tpu.matmul %60, %3, %cst_20 {dimension_numbers = #tpu.dot_dimension_numbers<[1], [0], [0], [1], [0, 0, 1, 1], [], []>} : vector<64x32xf32>, vector<32x8xf32>, vector<64x8xf32> -> vector<64x8xf32>
    %62 = vector.broadcast %4 : vector<1x8xf32> to vector<64x8xf32>
    %63 = arith.addf %61, %62 : vector<64x8xf32>
    %cst_21 = arith.constant dense<0xFF800000> : vector<64xf32>
    %64 = vector.multi_reduction <maximumf>, %63, %cst_21 [1] : vector<64x8xf32> to vector<64xf32>
    %65 = vector.shape_cast %64 : vector<64xf32> to vector<64x1xf32>
    %66 = vector.broadcast %65 : vector<64x1xf32> to vector<64x8xf32>
    %67 = arith.subf %63, %66 : vector<64x8xf32>
    %68 = math.exp %67 : vector<64x8xf32>
    %cst_22 = arith.constant dense<0.000000e+00> : vector<64xf32>
    %69 = vector.multi_reduction <add>, %68, %cst_22 [1] : vector<64x8xf32> to vector<64xf32>
    %70 = vector.shape_cast %69 : vector<64xf32> to vector<64x1xf32>
    %71 = math.log %70 : vector<64x1xf32>
    %72 = vector.broadcast %71 : vector<64x1xf32> to vector<64x8xf32>
    %73 = arith.subf %67, %72 : vector<64x8xf32>
    %74 = vector.shape_cast %73 : vector<64x8xf32> to vector<8x8x8xf32>
    %c0_23 = arith.constant 0 : index
    %c0_24 = arith.constant 0 : index
    %c0_25 = arith.constant 0 : index
    %75 = vector.load %arg7[%c0_23, %c0_24, %c0_25] : memref<8x8x8xf32, #tpu.memory_space<vmem>>, vector<8x8x8xf32>
    tpu.vector_store %arg7[%c0_23, %c0_24, %c0_25], %74 {strides = array<i32>} : memref<8x8x8xf32, #tpu.memory_space<vmem>>, vector<8x8x8xf32>,
    return
  }
  func.func @transform_0(%arg0: i32) -> (i32, i32, i32) {
    %c0_i32 = arith.constant 0 : i32
    %c0_i32_0 = arith.constant 0 : i32
    %c0_i32_1 = arith.constant 0 : i32
    return %c0_i32, %arg0, %c0_i32_0 : i32, i32, i32
  }
  func.func @transform_1(%arg0: i32) -> (i32, i32) {
    %c0_i32 = arith.constant 0 : i32
    %c0_i32_0 = arith.constant 0 : i32
    %c0_i32_1 = arith.constant 0 : i32
    return %c0_i32, %c0_i32_0 : i32, i32
  }
  func.func @transform_2(%arg0: i32) -> (i32, i32) {
    %c0_i32 = arith.constant 0 : i32
    %c0_i32_0 = arith.constant 0 : i32
    %c0_i32_1 = arith.constant 0 : i32
    return %c0_i32, %c0_i32_0 : i32, i32
  }
  func.func @transform_3(%arg0: i32) -> (i32, i32) {
    %c0_i32 = arith.constant 0 : i32
    %c0_i32_0 = arith.constant 0 : i32
    %c0_i32_1 = arith.constant 0 : i32
    return %c0_i32, %c0_i32_0 : i32, i32
  }
  func.func @transform_4(%arg0: i32) -> (i32, i32) {
    %c0_i32 = arith.constant 0 : i32
    %c0_i32_0 = arith.constant 0 : i32
    %c0_i32_1 = arith.constant 0 : i32
    return %c0_i32, %c0_i32_0 : i32, i32
  }
  func.func @transform_5(%arg0: i32) -> (i32, i32) {
    %c0_i32 = arith.constant 0 : i32
    %c0_i32_0 = arith.constant 0 : i32
    %c0_i32_1 = arith.constant 0 : i32
    return %c0_i32, %c0_i32_0 : i32, i32
  }
  func.func @transform_6(%arg0: i32) -> (i32, i32, i32) {
    %c0_i32 = arith.constant 0 : i32
    %c0_i32_0 = arith.constant 0 : i32
    %c0_i32_1 = arith.constant 0 : i32
    return %c0_i32, %arg0, %c0_i32_0 : i32, i32, i32
  }
}

</mosaic_0001>

<llo_original>
// kernel: tpu_custom_call.1
$region0: #{tpu_custom_call.1}
  #allocation0 [shape = 'u32[]', space=smem, size = 0x4, offset = 0x4, fixed_abs, tag = 'smem constant byte address 0x4 - core index']
  #allocation1 [shape = 'u32[144,128]{1,0:T(1,128)}', space=vmem, size = 0x12000, scoped, tag = 'internal scratch']
  %s0 = inlined_call_operand.hbm [shape: f32[8,16,16], index: 0, kind: input, shape index: {}]
  %s1 = inlined_call_operand.hbm [shape: f32[16,32], index: 1, kind: input, shape index: {}]
  %s2 = inlined_call_operand.vmem [shape: f32[32,32], index: 2, kind: input, shape index: {}]
  %s3 = inlined_call_operand.vmem [shape: f32[1,32], index: 3, kind: input, shape index: {}]
  %s4 = inlined_call_operand.vmem [shape: f32[32,8], index: 4, kind: input, shape index: {}]
  %s5 = inlined_call_operand.vmem [shape: f32[1,8], index: 5, kind: input, shape index: {}]
  %s6 = inlined_call_operand.vmem [shape: f32[8,16,8], index: 6, kind: output, shape index: {}]
  %s7 = sld [smem:[#allocation0]]
  $region99: #{tpu_custom_call.1} parent=0
    _
  %s9 = ssub.s32 1, %s7
  %s10 = scalar_select 0, %s9, %s7
  $region1: #{tpu_custom_call.1} parent=0
    #allocation2 [shape = 'u8[65536]{0}', space=vmem, size = 0x10000, scoped, tag = 'input window, operand 0']
    #allocation3 [shape = 's32[2]{0}', space=sflag, size = 0x8, scoped, tag = 'scoped memory for tpu_custom_call.1']
    #allocation4 [shape = 'u8[8192]{0}', space=vmem, size = 0x2000, scoped, tag = 'input window, operand 1, single buffered']
    #allocation5 [shape = 's32[1]{0}', space=sflag, size = 0x4, scoped, tag = 'scoped memory for tpu_custom_call.1']
    #allocation6 [shape = 'u8[65536]{0}', space=vmem, size = 0x10000, scoped, tag = 'output window, operand 0']
    %11 = vsyncpa [#allocation3], 0
    %s12 = scalar_lea.sflag [#allocation3], 1
    %13 = vsyncpa %s12, 0
    %14 = vsyncpa [#allocation5], 0
    loop: start=0, step=1, limit=4
    $region2: #{tpu_custom_call.1} parent=1 // loop_pre_header
      _
    $region3: #{tpu_custom_call.1} parent=1 // loop_header
      %s16 = sphi 0, %s20
      %p17 = scmp.ge.s32.totalorder %s16, 4
      %s26 = sphi 0, %s28
      %s29 = sphi 0, %s26
      %s30 = sphi 0, %s29
      %s46 = sphi 0, %s30
      %s50 = sphi 0, %s50
      %s52 = sphi 0, %s50
      %s53 = sphi 0, %s52
      %s67 = sphi 0, %s53
      %s71 = sphi 0, %s71
      %s73 = sphi 0, %s71
      %s74 = sphi 0, %s73
      %s88 = sphi 0, %s74
      %s92 = sphi 0, %s92
      %s94 = sphi 0, %s92
      %s95 = sphi 0, %s94
      %s109 = sphi 0, %s95
      %s113 = sphi 0, %s113
      %s115 = sphi 0, %s113
      %s116 = sphi 0, %s115
      %s130 = sphi 0, %s116
      %s134 = sphi 0, %s134
      %s136 = sphi 0, %s134
      %s137 = sphi 0, %s136
      %s151 = sphi 0, %s137
      %s157 = sphi 0, %s159
      %s160 = sphi 0, %s157
      %s161 = sphi 0, %s160
      %s177 = sphi 0, %s161
    $region4: #{tpu_custom_call.1} parent=1 // loop_header_branch
      %19 = sbr.rel (%p17) target = $region8
    $region5: #{tpu_custom_call.1} parent=1 // loop_body
      %s21 = ssub.s32 %s16, 1
      %s22 = ssub.s32 %s16, 2
      %s23 = sadd.s32 %s16, 1
      %s24 = ssub.s32 %s16, %s23
      %p25 = scmp.eq.s32.totalorder %s24, 0
      %s27 = sadd.s32 %s26, 1
      %s28 = scalar_select %p25, %s26, %s27
      %p31 = pneg %p25
      %p32 = scmp.eq.s32.totalorder %s16, 1
      %p33 = por %p31, %p32
      %p34 = scmp.ne.s32.totalorder %s26, %s29
      %p35 = scmp.eq.s32.totalorder %s16, 0
      %p36 = por %p34, %p35
      %p37 = scmp.ne.s32.totalorder %s26, %s29
      %p38 = scmp.eq.s32.totalorder %s21, 1
      %p39 = por %p37, %p38
      %p40 = scmp.ne.s32.totalorder %s29, %s30
      %p41 = scmp.eq.s32.totalorder %s21, 0
      %p42 = por %p40, %p41
      %p43 = scmp.ne.s32.totalorder %s29, %s30
      %p44 = scmp.eq.s32.totalorder %s22, 1
      %p45 = por %p43, %p44
      %p47 = scmp.ne.s32.totalorder %s30, %s46
      %p48 = scmp.eq.s32.totalorder %s22, 0
      %p49 = por %p47, %p48
      %s51 = sadd.s32 %s50, 1
      %p54 = scmp.eq.s32.totalorder %s16, 1
      %p55 = scmp.ne.s32.totalorder %s50, %s52
      %p56 = scmp.eq.s32.totalorder %s16, 0
      %p57 = por %p55, %p56
      %p58 = scmp.ne.s32.totalorder %s50, %s52
      %p59 = scmp.eq.s32.totalorder %s21, 1
      %p60 = por %p58, %p59
      %p61 = scmp.ne.s32.totalorder %s52, %s53
      %p62 = scmp.eq.s32.totalorder %s21, 0
      %p63 = por %p61, %p62
      %p64 = scmp.ne.s32.totalorder %s52, %s53
      %p65 = scmp.eq.s32.totalorder %s22, 1
      %p66 = por %p64, %p65
      %p68 = scmp.ne.s32.totalorder %s53, %s67
      %p69 = scmp.eq.s32.totalorder %s22, 0
      %p70 = por %p68, %p69
      %s72 = sadd.s32 %s71, 1
      %p75 = scmp.eq.s32.totalorder %s16, 1
      %p76 = scmp.ne.s32.totalorder %s71, %s73
      %p77 = scmp.eq.s32.totalorder %s16, 0
      %p78 = por %p76, %p77
      %p79 = scmp.ne.s32.totalorder %s71, %s73
      %p80 = scmp.eq.s32.totalorder %s21, 1
      %p81 = por %p79, %p80
      %p82 = scmp.ne.s32.totalorder %s73, %s74
      %p83 = scmp.eq.s32.totalorder %s21, 0
      %p84 = por %p82, %p83
      %p85 = scmp.ne.s32.totalorder %s73, %s74
      %p86 = scmp.eq.s32.totalorder %s22, 1
      %p87 = por %p85, %p86
      %p89 = scmp.ne.s32.totalorder %s74, %s88
      %p90 = scmp.eq.s32.totalorder %s22, 0
      %p91 = por %p89, %p90
      %s93 = sadd.s32 %s92, 1
      %p96 = scmp.eq.s32.totalorder %s16, 1
      %p97 = scmp.ne.s32.totalorder %s92, %s94
      %p98 = scmp.eq.s32.totalorder %s16, 0
      %p99 = por %p97, %p98
      %p100 = scmp.ne.s32.totalorder %s92, %s94
      %p101 = scmp.eq.s32.totalorder %s21, 1
      %p102 = por %p100, %p101
      %p103 = scmp.ne.s32.totalorder %s94, %s95
      %p104 = scmp.eq.s32.totalorder %s21, 0
      %p105 = por %p103, %p104
      %p106 = scmp.ne.s32.totalorder %s94, %s95
      %p107 = scmp.eq.s32.totalorder %s22, 1
      %p108 = por %p106, %p107
      %p110 = scmp.ne.s32.totalorder %s95, %s109
      %p111 = scmp.eq.s32.totalorder %s22, 0
      %p112 = por %p110, %p111
      %s114 = sadd.s32 %s113, 1
      %p117 = scmp.eq.s32.totalorder %s16, 1
      %p118 = scmp.ne.s32.totalorder %s113, %s115
      %p119 = scmp.eq.s32.totalorder %s16, 0
      %p120 = por %p118, %p119
      %p121 = scmp.ne.s32.totalorder %s113, %s115
      %p122 = scmp.eq.s32.totalorder %s21, 1
      %p123 = por %p121, %p122
      %p124 = scmp.ne.s32.totalorder %s115, %s116
      %p125 = scmp.eq.s32.totalorder %s21, 0
      %p126 = por %p124, %p125
      %p127 = scmp.ne.s32.totalorder %s115, %s116
      %p128 = scmp.eq.s32.totalorder %s22, 1
      %p129 = por %p127, %p128
      %p131 = scmp.ne.s32.totalorder %s116, %s130
      %p132 = scmp.eq.s32.totalorder %s22, 0
      %p133 = por %p131, %p132
      %s135 = sadd.s32 %s134, 1
      %p138 = scmp.eq.s32.totalorder %s16, 1
      %p139 = scmp.ne.s32.totalorder %s134, %s136
      %p140 = scmp.eq.s32.totalorder %s16, 0
      %p141 = por %p139, %p140
      %p142 = scmp.ne.s32.totalorder %s134, %s136
      %p143 = scmp.eq.s32.totalorder %s21, 1
      %p144 = por %p142, %p143
      %p145 = scmp.ne.s32.totalorder %s136, %s137
      %p146 = scmp.eq.s32.totalorder %s21, 0
      %p147 = por %p145, %p146
      %p148 = scmp.ne.s32.totalorder %s136, %s137
      %p149 = scmp.eq.s32.totalorder %s22, 1
      %p150 = por %p148, %p149
      %p152 = scmp.ne.s32.totalorder %s137, %s151
      %p153 = scmp.eq.s32.totalorder %s22, 0
      %p154 = por %p152, %p153
      %s155 = ssub.s32 %s16, %s23
      %p156 = scmp.eq.s32.totalorder %s155, 0
      %s158 = sadd.s32 %s157, 1
      %s159 = scalar_select %p156, %s157, %s158
      %p162 = pneg %p156
      %p163 = scmp.eq.s32.totalorder %s16, 1
      %p164 = por %p162, %p163
      %p165 = scmp.ne.s32.totalorder %s157, %s160
      %p166 = scmp.eq.s32.totalorder %s16, 0
      %p167 = por %p165, %p166
      %p168 = scmp.ne.s32.totalorder %s157, %s160
      %p169 = scmp.eq.s32.totalorder %s21, 1
      %p170 = por %p168, %p169
      %p171 = scmp.ne.s32.totalorder %s160, %s161
      %p172 = scmp.eq.s32.totalorder %s21, 0
      %p173 = por %p171, %p172
      %p174 = scmp.ne.s32.totalorder %s160, %s161
      %p175 = scmp.eq.s32.totalorder %s22, 1
      %p176 = por %p174, %p175
      %p178 = scmp.ne.s32.totalorder %s161, %s177
      %p179 = scmp.eq.s32.totalorder %s22, 0
      %p180 = por %p178, %p179
      %p181 = scmp.le.s32.totalorder 1, %s16
      %p182 = scmp.lt.s32.totalorder %s16, 3
      %p183 = pnand %p181, %p182
      %p184 = pneg %p183
      // Predicated region
      $region9: #{tpu_custom_call.1} parent=5 // pred_check
        _
      $region10: #{tpu_custom_call.1} parent=5 // pred_check_branch
        %186 = sbr.rel (%p183) target = $region12
      $region11: #{tpu_custom_call.1} parent=5 // pred_region
        %s187 = ssub.s32 %s16, 1
        // Predicated region
        $region13: #{tpu_custom_call.1} parent=11 // pred_check
          %p188 = pneg %p63
        $region14: #{tpu_custom_call.1} parent=11 // pred_check_branch
          %190 = sbr.rel (%p188) target = $region16
        $region15: #{tpu_custom_call.1} parent=11 // pred_region
          %s192 = ssub.s32 256, 256
          %193 = vsyncadd [#allocation5], %s192
          %s194 = sshll.u32 [#allocation4], 4
          %s195 = int_to_ptr.vmem [resolvable:$true] %s194
          %200 = dma.hbm_to_vmem [thread:$0]  %s1, 256, %s195, [#allocation5], 128, 128, 8
        $region16: #{tpu_custom_call.1} parent=11 // pred_fallthru
          _
        // Predicated region
        $region17: #{tpu_custom_call.1} parent=11 // pred_check
          %p201 = pneg %p84
        $region18: #{tpu_custom_call.1} parent=11 // pred_check_branch
          %203 = sbr.rel (%p201) target = $region20
        $region19: #{tpu_custom_call.1} parent=11 // pred_region
          _
        $region20: #{tpu_custom_call.1} parent=11 // pred_fallthru
          _
        // Predicated region
        $region21: #{tpu_custom_call.1} parent=11 // pred_check
          %p204 = pneg %p105
        $region22: #{tpu_custom_call.1} parent=11 // pred_check_branch
          %206 = sbr.rel (%p204) target = $region24
        $region23: #{tpu_custom_call.1} parent=11 // pred_region
          _
        $region24: #{tpu_custom_call.1} parent=11 // pred_fallthru
          _
        // Predicated region
        $region25: #{tpu_custom_call.1} parent=11 // pred_check
          %p207 = pneg %p126
        $region26: #{tpu_custom_call.1} parent=11 // pred_check_branch
          %209 = sbr.rel (%p207) target = $region28
        $region27: #{tpu_custom_call.1} parent=11 // pred_region
          _
        $region28: #{tpu_custom_call.1} parent=11 // pred_fallthru
          _
        // Predicated region
        $region29: #{tpu_custom_call.1} parent=11 // pred_check
          %p210 = pneg %p147
        $region30: #{tpu_custom_call.1} parent=11 // pred_check_branch
          %212 = sbr.rel (%p210) target = $region32
        $region31: #{tpu_custom_call.1} parent=11 // pred_region
          _
        $region32: #{tpu_custom_call.1} parent=11 // pred_fallthru
          _
      $region12: #{tpu_custom_call.1} parent=5 // pred_fallthru
        _
      %p213 = scmp.lt.s32.totalorder %s16, 2
      // Predicated region
      $region33: #{tpu_custom_call.1} parent=5 // pred_check
        %p214 = pneg %p213
      $region34: #{tpu_custom_call.1} parent=5 // pred_check_branch
        %216 = sbr.rel (%p214) target = $region36
      $region35: #{tpu_custom_call.1} parent=5 // pred_region
        // Predicated region
        $region37: #{tpu_custom_call.1} parent=35 // pred_check
          %p217 = pneg %p36
        $region38: #{tpu_custom_call.1} parent=35 // pred_check_branch
          %219 = sbr.rel (%p217) target = $region40
        $region39: #{tpu_custom_call.1} parent=35 // pred_region
          %s220 = sand.u32 %s26, 1
          %s221 = scalar_lea.sflag [#allocation3], %s220
          %s222 = sand.u32 %s26, 1
          %s223 = smul.addr %s222, 64
          %s224 = scalar_lea.vmem [#allocation2], %s223
          %s226 = ssub.s32 1024, 1024
          %227 = vsyncadd %s221, %s226
          %s228 = smul.addr %s16, 128
          %s229 = scalar_lea.hbm %s0, %s228
          %s230 = sshll.u32 %s224, 4
          %s231 = int_to_ptr.vmem [resolvable:$true] %s230
          %236 = dma.hbm_to_vmem [thread:$0]  %s229, 1024, %s231, %s221, 256, 128, 8
        $region40: #{tpu_custom_call.1} parent=35 // pred_fallthru
          _
      $region36: #{tpu_custom_call.1} parent=5 // pred_fallthru
        _
      %p237 = scmp.le.s32.totalorder 1, %s16
      %p238 = scmp.lt.s32.totalorder %s16, 3
      %p239 = pnand %p237, %p238
      %p240 = pneg %p239
      // Predicated region
      $region41: #{tpu_custom_call.1} parent=5 // pred_check
        _
      $region42: #{tpu_custom_call.1} parent=5 // pred_check_branch
        %242 = sbr.rel (%p239) target = $region44
      $region43: #{tpu_custom_call.1} parent=5 // pred_region
        %s243 = ssub.s32 %s16, 1
        %s244 = sand.u32 %s29, 1
        %s245 = scalar_lea.sflag [#allocation3], %s244
        %s246 = sand.u32 %s29, 1
        %s247 = smul.addr %s246, 64
        %s248 = scalar_lea.vmem [#allocation2], %s247
        // Predicated region
        $region45: #{tpu_custom_call.1} parent=43 // pred_check
          %p249 = pneg %p42
        $region46: #{tpu_custom_call.1} parent=43 // pred_check_branch
          %251 = sbr.rel (%p249) target = $region48
        $region47: #{tpu_custom_call.1} parent=43 // pred_region
          %252 = dma.done %s245, 1024
        $region48: #{tpu_custom_call.1} parent=43 // pred_fallthru
          _
        // Predicated region
        $region49: #{tpu_custom_call.1} parent=43 // pred_check
          %p253 = pneg %p63
        $region50: #{tpu_custom_call.1} parent=43 // pred_check_branch
          %255 = sbr.rel (%p253) target = $region52
        $region51: #{tpu_custom_call.1} parent=43 // pred_region
          %256 = dma.done [#allocation5], 256
        $region52: #{tpu_custom_call.1} parent=43 // pred_fallthru
          _
        %s257 = sand.u32 %s29, 1
        %s258 = scalar_lea.sflag [#allocation3], %s257
        %s259 = sand.u32 %s29, 1
        %s260 = smul.addr %s259, 64
        %s261 = scalar_lea.vmem [#allocation2], %s260
        %p262 = pneg %p42
        %p263 = pneg %p39
        %p264 = pneg %p63
        %p265 = pneg %p60
        %p266 = pneg %p84
        %p267 = pneg %p81
        %p268 = pneg %p105
        %p269 = pneg %p102
        %p270 = pneg %p126
        %p271 = pneg %p123
        %p272 = pneg %p147
        %p273 = pneg %p144
        %p274 = pneg %p173
        %p275 = pneg %p170
        %s276 = sand.u32 %s160, 1
        %s277 = sand.u32 %s160, 1
        %s278 = smul.addr %s277, 64
        %s279 = scalar_lea.vmem [#allocation6], %s278
        %v280 = vld [vmem:[#allocation4] sm:$0xff]
        %v281 = vld [vmem:[#allocation4 + $0x8] sm:$0xff]
        %v282 = vld [vmem:[%s2] sm:$0xff]
        %v283 = vld [vmem:[%s2 + $0x8] sm:$0xff]
        %v284 = vld [vmem:[%s2 + $0x10] sm:$0xff]
        %v285 = vld [vmem:[%s2 + $0x18] sm:$0xff]
        %v286 = vld [vmem:[%s3] sm:$0x1]
        %v287 = vld [vmem:[%s4] sm:$0xff]
        %v288 = vld [vmem:[%s4 + $0x8] sm:$0xff]
        %v289 = vld [vmem:[%s4 + $0x10] sm:$0xff]
        %v290 = vld [vmem:[%s4 + $0x18] sm:$0xff]
        %v291 = vld [vmem:[%s5] sm:$0x1]
        %v292 = vld [vmem:[%s248] sm:$0xff]
        %v293 = vld [vmem:[%s248 + $0x8] sm:$0xff]
        %v294 = vld [vmem:[%s248 + $0x10] sm:$0xff]
        %v295 = vld [vmem:[%s248 + $0x18] sm:$0xff]
        %v296 = vld [vmem:[%s248 + $0x20] sm:$0xff]
        %v297 = vld [vmem:[%s248 + $0x28] sm:$0xff]
        %v298 = vld [vmem:[%s248 + $0x30] sm:$0xff]
        %v299 = vld [vmem:[%s248 + $0x38] sm:$0xff]
        %v301 = vlaneseq
        %v302 = vshrl.u32 %v301, 7
        %v303 = vsub.s32 0, %v302
        %v304 = vrot.slane %v286, %v303
        %vm306 = vcmask 130048
        %v308 = vsel %vm306, %v292, 0
        %v311 = vsel %vm306, %v293, 0
        %v314 = vsel %vm306, %v294, 0
        %v317 = vsel %vm306, %v295, 0
        %v320 = vsel %vm306, %v296, 0
        %v323 = vsel %vm306, %v297, 0
        %v326 = vsel %vm306, %v298, 0
        %v329 = vsel %vm306, %v299, 0
        %331 = vmatprep.subr.mxu0 0.0
        %332 = vmatpush1.msra.mxu0 %v280
        %333 = vmatprep.subr.mxu0 0.0
        %334 = vmatpush1.msra.mxu0 %v281
        %335 = vmatprep.subr.mxu0 0.0
        %336 = vmatpush1.msra.mxu0 0.0
        %337 = vmatprep.subr.mxu0 0.0
        %338 = vmatpush1.msra.mxu0 0.0
        %339 = vmatprep.subr.mxu0 0.0
        %340 = vmatpush1.msra.mxu0 0.0
        %341 = vmatprep.subr.mxu0 0.0
        %342 = vmatpush1.msra.mxu0 0.0
        %343 = vmatprep.subr.mxu0 0.0
        %344 = vmatpush1.msra.mxu0 0.0
        %345 = vmatprep.subr.mxu0 0.0
        %346 = vmatpush1.msra.mxu0 0.0
        %347 = vmatprep.subr.mxu0 0.0
        %348 = vmatpush1.msra.mxu0 0.0
        %349 = vmatprep.subr.mxu0 0.0
        %350 = vmatpush1.msra.mxu0 0.0
        %351 = vmatprep.subr.mxu0 0.0
        %352 = vmatpush1.msra.mxu0 0.0
        %353 = vmatprep.subr.mxu0 0.0
        %354 = vmatpush1.msra.mxu0 0.0
        %355 = vmatprep.subr.mxu0 0.0
        %356 = vmatpush1.msra.mxu0 0.0
        %357 = vmatprep.subr.mxu0 0.0
        %358 = vmatpush1.msra.mxu0 0.0
        %359 = vmatprep.subr.mxu0 0.0
        %360 = vmatpush1.msra.mxu0 0.0
        %361 = vmatprep.subr.mxu0 0.0
        %362 = vmatpush1.msra.mxu0 0.0
        %363 = vmatprep.subr.mxu0 0.0
        %364 = vmatpush1.msra.mxu0 0.0
        %365 = vmatprep.subr.mxu0 0.0
        %366 = vmatpush1.msra.mxu0 0.0
        %367 = vmatprep.subr.mxu0 0.0
        %368 = vmatpush1.msra.mxu0 0.0
        %369 = vmatprep.subr.mxu0 0.0
        %370 = vmatpush1.msra.mxu0 0.0
        %371 = vmatprep.subr.mxu0 0.0
        %372 = vmatpush1.msra.mxu0 0.0
        %373 = vmatprep.subr.mxu0 0.0
        %374 = vmatpush1.msra.mxu0 0.0
        %375 = vmatprep.subr.mxu0 0.0
        %376 = vmatpush1.msra.mxu0 0.0
        %377 = vmatprep.subr.mxu0 0.0
        %378 = vmatpush1.msra.mxu0 0.0
        %379 = vmatprep.subr.mxu0 0.0
        %380 = vmatpush1.msra.mxu0 0.0
        %381 = vmatprep.subr.mxu0 0.0
        %382 = vmatpush1.msra.mxu0 0.0
        %383 = vmatprep.subr.mxu0 0.0
        %384 = vmatpush1.msra.mxu0 0.0
        %385 = vmatprep.subr.mxu0 0.0
        %386 = vmatpush1.msra.mxu0 0.0
        %387 = vmatprep.subr.mxu0 0.0
        %388 = vmatpush1.msra.mxu0 0.0
        %389 = vmatprep.subr.mxu0 0.0
        %390 = vmatpush1.msra.mxu0 0.0
        %391 = vmatprep.subr.mxu0 0.0
        %392 = vmatpush1.msra.mxu0 0.0
        %393 = vmatprep.subr.mxu0 0.0
        %394 = vmatpush1.msra.mxu0 0.0
        %395 = vmatprep.mubr.f32.mxu0 0.0
        %396 = vmatmul.mubr.f32.gmra.mrb[0].mxu0 %v308
        %v397 = vpop.f32.mrb[0].mxu0
        %v398 = vadd.f32 %v304, %v397
        %v399 = vpop.f32.mrb[0].mxu0
        %400 = vmatprep.mubr.f32.mxu0 0.0
        %401 = vmatmul.mubr.f32.gmra.mrb[0].mxu0 %v311
        %v402 = vpop.f32.mrb[0].mxu0
        %v403 = vadd.f32 %v304, %v402
        %v404 = vpop.f32.mrb[0].mxu0
        %405 = vmatprep.mubr.f32.mxu0 0.0
        %406 = vmatmul.mubr.f32.gmra.mrb[0].mxu0 %v314
        %v407 = vpop.f32.mrb[0].mxu0
        %v408 = vadd.f32 %v304, %v407
        %v409 = vpop.f32.mrb[0].mxu0
        %410 = vmatprep.mubr.f32.mxu0 0.0
        %411 = vmatmul.mubr.f32.gmra.mrb[0].mxu0 %v317
        %v412 = vpop.f32.mrb[0].mxu0
        %v413 = vadd.f32 %v304, %v412
        %v414 = vpop.f32.mrb[0].mxu0
        %415 = vmatprep.mubr.f32.mxu0 0.0
        %416 = vmatmul.mubr.f32.gmra.mrb[0].mxu0 %v320
        %v417 = vpop.f32.mrb[0].mxu0
        %v418 = vadd.f32 %v304, %v417
        %v419 = vpop.f32.mrb[0].mxu0
        %420 = vmatprep.mubr.f32.mxu0 0.0
        %421 = vmatmul.mubr.f32.gmra.mrb[0].mxu0 %v323
        %v422 = vpop.f32.mrb[0].mxu0
        %v423 = vadd.f32 %v304, %v422
        %v424 = vpop.f32.mrb[0].mxu0
        %425 = vmatprep.mubr.f32.mxu0 0.0
        %426 = vmatmul.mubr.f32.gmra.mrb[0].mxu0 %v326
        %v427 = vpop.f32.mrb[0].mxu0
        %v428 = vadd.f32 %v304, %v427
        %v429 = vpop.f32.mrb[0].mxu0
        %430 = vmatprep.mubr.f32.mxu0 0.0
        %431 = vmatmul.mubr.f32.gmra.mrb[0].mxu0 %v329
        %v432 = vpop.f32.mrb[0].mxu0
        %v433 = vadd.f32 %v304, %v432
        %v434 = vpop.f32.mrb[0].mxu0
        %435 = vdwg.mxu0
        %v436 = vtanh.pop %v398
        %vm437 = vcmask 261120
        %v439 = vsel %vm437, %v436, 0
        %441 = vmatprep.subr.mxu0 0.0
        %442 = vmatpush1.msra.mxu0 %v282
        %443 = vmatprep.subr.mxu0 0.0
        %444 = vmatpush1.msra.mxu0 %v283
        %445 = vmatprep.subr.mxu0 0.0
        %446 = vmatpush1.msra.mxu0 %v284
        %447 = vmatprep.subr.mxu0 0.0
        %448 = vmatpush1.msra.mxu0 %v285
        %449 = vmatprep.subr.mxu0 0.0
        %450 = vmatpush1.msra.mxu0 0.0
        %451 = vmatprep.subr.mxu0 0.0
        %452 = vmatpush1.msra.mxu0 0.0
        %453 = vmatprep.subr.mxu0 0.0
        %454 = vmatpush1.msra.mxu0 0.0
        %455 = vmatprep.subr.mxu0 0.0
        %456 = vmatpush1.msra.mxu0 0.0
        %457 = vmatprep.subr.mxu0 0.0
        %458 = vmatpush1.msra.mxu0 0.0
        %459 = vmatprep.subr.mxu0 0.0
        %460 = vmatpush1.msra.mxu0 0.0
        %461 = vmatprep.subr.mxu0 0.0
        %462 = vmatpush1.msra.mxu0 0.0
        %463 = vmatprep.subr.mxu0 0.0
        %464 = vmatpush1.msra.mxu0 0.0
        %465 = vmatprep.subr.mxu0 0.0
        %466 = vmatpush1.msra.mxu0 0.0
        %467 = vmatprep.subr.mxu0 0.0
        %468 = vmatpush1.msra.mxu0 0.0
        %469 = vmatprep.subr.mxu0 0.0
        %470 = vmatpush1.msra.mxu0 0.0
        %471 = vmatprep.subr.mxu0 0.0
        %472 = vmatpush1.msra.mxu0 0.0
        %473 = vmatprep.subr.mxu0 0.0
        %474 = vmatpush1.msra.mxu0 0.0
        %475 = vmatprep.subr.mxu0 0.0
        %476 = vmatpush1.msra.mxu0 0.0
        %477 = vmatprep.subr.mxu0 0.0
        %478 = vmatpush1.msra.mxu0 0.0
        %479 = vmatprep.subr.mxu0 0.0
        %480 = vmatpush1.msra.mxu0 0.0
        %481 = vmatprep.subr.mxu0 0.0
        %482 = vmatpush1.msra.mxu0 0.0
        %483 = vmatprep.subr.mxu0 0.0
        %484 = vmatpush1.msra.mxu0 0.0
        %485 = vmatprep.subr.mxu0 0.0
        %486 = vmatpush1.msra.mxu0 0.0
        %487 = vmatprep.subr.mxu0 0.0
        %488 = vmatpush1.msra.mxu0 0.0
        %489 = vmatprep.subr.mxu0 0.0
        %490 = vmatpush1.msra.mxu0 0.0
        %491 = vmatprep.subr.mxu0 0.0
        %492 = vmatpush1.msra.mxu0 0.0
        %493 = vmatprep.subr.mxu0 0.0
        %494 = vmatpush1.msra.mxu0 0.0
        %495 = vmatprep.subr.mxu0 0.0
        %496 = vmatpush1.msra.mxu0 0.0
        %497 = vmatprep.subr.mxu0 0.0
        %498 = vmatpush1.msra.mxu0 0.0
        %499 = vmatprep.subr.mxu0 0.0
        %500 = vmatpush1.msra.mxu0 0.0
        %501 = vmatprep.subr.mxu0 0.0
        %502 = vmatpush1.msra.mxu0 0.0
        %503 = vmatprep.subr.mxu0 0.0
        %504 = vmatpush1.msra.mxu0 0.0
        %505 = vmatprep.mubr.f32.mxu0 0.0
        %506 = vmatmul.mubr.f32.gmra.mrb[0].mxu0 %v439
        %v507 = vpop.f32.mrb[0].mxu0
        %v508 = vadd.f32 0.0, %v507
        %v509 = vpop.f32.mrb[0].mxu0
        %510 = vdwg.mxu0
        %v511 = vadd.f32 %v403, %v508
        %v512 = vtanh.pop %v511
        %v514 = vsel %vm437, %v512, 0
        %516 = vmatprep.subr.mxu0 0.0
        %517 = vmatpush1.msra.mxu0 %v282
        %518 = vmatprep.subr.mxu0 0.0
        %519 = vmatpush1.msra.mxu0 %v283
        %520 = vmatprep.subr.mxu0 0.0
        %521 = vmatpush1.msra.mxu0 %v284
        %522 = vmatprep.subr.mxu0 0.0
        %523 = vmatpush1.msra.mxu0 %v285
        %524 = vmatprep.subr.mxu0 0.0
        %525 = vmatpush1.msra.mxu0 0.0
        %526 = vmatprep.subr.mxu0 0.0
        %527 = vmatpush1.msra.mxu0 0.0
        %528 = vmatprep.subr.mxu0 0.0
        %529 = vmatpush1.msra.mxu0 0.0
        %530 = vmatprep.subr.mxu0 0.0
        %531 = vmatpush1.msra.mxu0 0.0
        %532 = vmatprep.subr.mxu0 0.0
        %533 = vmatpush1.msra.mxu0 0.0
        %534 = vmatprep.subr.mxu0 0.0
        %535 = vmatpush1.msra.mxu0 0.0
        %536 = vmatprep.subr.mxu0 0.0
        %537 = vmatpush1.msra.mxu0 0.0
        %538 = vmatprep.subr.mxu0 0.0
        %539 = vmatpush1.msra.mxu0 0.0
        %540 = vmatprep.subr.mxu0 0.0
        %541 = vmatpush1.msra.mxu0 0.0
        %542 = vmatprep.subr.mxu0 0.0
        %543 = vmatpush1.msra.mxu0 0.0
        %544 = vmatprep.subr.mxu0 0.0
        %545 = vmatpush1.msra.mxu0 0.0
        %546 = vmatprep.subr.mxu0 0.0
        %547 = vmatpush1.msra.mxu0 0.0
        %548 = vmatprep.subr.mxu0 0.0
        %549 = vmatpush1.msra.mxu0 0.0
        %550 = vmatprep.subr.mxu0 0.0
        %551 = vmatpush1.msra.mxu0 0.0
        %552 = vmatprep.subr.mxu0 0.0
        %553 = vmatpush1.msra.mxu0 0.0
        %554 = vmatprep.subr.mxu0 0.0
        %555 = vmatpush1.msra.mxu0 0.0
        %556 = vmatprep.subr.mxu0 0.0
        %557 = vmatpush1.msra.mxu0 0.0
        %558 = vmatprep.subr.mxu0 0.0
        %559 = vmatpush1.msra.mxu0 0.0
        %560 = vmatprep.subr.mxu0 0.0
        %561 = vmatpush1.msra.mxu0 0.0
        %562 = vmatprep.subr.mxu0 0.0
        %563 = vmatpush1.msra.mxu0 0.0
        %564 = vmatprep.subr.mxu0 0.0
        %565 = vmatpush1.msra.mxu0 0.0
        %566 = vmatprep.subr.mxu0 0.0
        %567 = vmatpush1.msra.mxu0 0.0
        %568 = vmatprep.subr.mxu0 0.0
        %569 = vmatpush1.msra.mxu0 0.0
        %570 = vmatprep.subr.mxu0 0.0
        %571 = vmatpush1.msra.mxu0 0.0
        %572 = vmatprep.subr.mxu0 0.0
        %573 = vmatpush1.msra.mxu0 0.0
        %574 = vmatprep.subr.mxu0 0.0
        %575 = vmatpush1.msra.mxu0 0.0
        %576 = vmatprep.subr.mxu0 0.0
        %577 = vmatpush1.msra.mxu0 0.0
        %578 = vmatprep.subr.mxu0 0.0
        %579 = vmatpush1.msra.mxu0 0.0
        %580 = vmatprep.mubr.f32.mxu0 0.0
        %581 = vmatmul.mubr.f32.gmra.mrb[0].mxu0 %v514
        %v582 = vpop.f32.mrb[0].mxu0
        %v583 = vadd.f32 0.0, %v582
        %v584 = vpop.f32.mrb[0].mxu0
        %585 = vdwg.mxu0
        %v586 = vadd.f32 %v408, %v583
        %v587 = vtanh.pop %v586
        %v589 = vsel %vm437, %v587, 0
        %591 = vmatprep.subr.mxu0 0.0
        %592 = vmatpush1.msra.mxu0 %v282
        %593 = vmatprep.subr.mxu0 0.0
        %594 = vmatpush1.msra.mxu0 %v283
        %595 = vmatprep.subr.mxu0 0.0
        %596 = vmatpush1.msra.mxu0 %v284
        %597 = vmatprep.subr.mxu0 0.0
        %598 = vmatpush1.msra.mxu0 %v285
        %599 = vmatprep.subr.mxu0 0.0
        %600 = vmatpush1.msra.mxu0 0.0
        %601 = vmatprep.subr.mxu0 0.0
        %602 = vmatpush1.msra.mxu0 0.0
        %603 = vmatprep.subr.mxu0 0.0
        %604 = vmatpush1.msra.mxu0 0.0
        %605 = vmatprep.subr.mxu0 0.0
        %606 = vmatpush1.msra.mxu0 0.0
        %607 = vmatprep.subr.mxu0 0.0
        %608 = vmatpush1.msra.mxu0 0.0
        %609 = vmatprep.subr.mxu0 0.0
        %610 = vmatpush1.msra.mxu0 0.0
        %611 = vmatprep.subr.mxu0 0.0
        %612 = vmatpush1.msra.mxu0 0.0
        %613 = vmatprep.subr.mxu0 0.0
        %614 = vmatpush1.msra.mxu0 0.0
        %615 = vmatprep.subr.mxu0 0.0
        %616 = vmatpush1.msra.mxu0 0.0
        %617 = vmatprep.subr.mxu0 0.0
        %618 = vmatpush1.msra.mxu0 0.0
        %619 = vmatprep.subr.mxu0 0.0
        %620 = vmatpush1.msra.mxu0 0.0
        %621 = vmatprep.subr.mxu0 0.0
        %622 = vmatpush1.msra.mxu0 0.0
        %623 = vmatprep.subr.mxu0 0.0
        %624 = vmatpush1.msra.mxu0 0.0
        %625 = vmatprep.subr.mxu0 0.0
        %626 = vmatpush1.msra.mxu0 0.0
        %627 = vmatprep.subr.mxu0 0.0
        %628 = vmatpush1.msra.mxu0 0.0
        %629 = vmatprep.subr.mxu0 0.0
        %630 = vmatpush1.msra.mxu0 0.0
        %631 = vmatprep.subr.mxu0 0.0
        %632 = vmatpush1.msra.mxu0 0.0
        %633 = vmatprep.subr.mxu0 0.0
        %634 = vmatpush1.msra.mxu0 0.0
        %635 = vmatprep.subr.mxu0 0.0
        %636 = vmatpush1.msra.mxu0 0.0
        %637 = vmatprep.subr.mxu0 0.0
        %638 = vmatpush1.msra.mxu0 0.0
        %639 = vmatprep.subr.mxu0 0.0
        %640 = vmatpush1.msra.mxu0 0.0
        %641 = vmatprep.subr.mxu0 0.0
        %642 = vmatpush1.msra.mxu0 0.0
        %643 = vmatprep.subr.mxu0 0.0
        %644 = vmatpush1.msra.mxu0 0.0
        %645 = vmatprep.subr.mxu0 0.0
        %646 = vmatpush1.msra.mxu0 0.0
        %647 = vmatprep.subr.mxu0 0.0
        %648 = vmatpush1.msra.mxu0 0.0
        %649 = vmatprep.subr.mxu0 0.0
        %650 = vmatpush1.msra.mxu0 0.0
        %651 = vmatprep.subr.mxu0 0.0
        %652 = vmatpush1.msra.mxu0 0.0
        %653 = vmatprep.subr.mxu0 0.0
        %654 = vmatpush1.msra.mxu0 0.0
        %655 = vmatprep.mubr.f32.mxu0 0.0
        %656 = vmatmul.mubr.f32.gmra.mrb[0].mxu0 %v589
        %v657 = vpop.f32.mrb[0].mxu0
        %v658 = vadd.f32 0.0, %v657
        %v659 = vpop.f32.mrb[0].mxu0
        %660 = vdwg.mxu0
        %v661 = vadd.f32 %v413, %v658
        %v662 = vtanh.pop %v661
        %v664 = vsel %vm437, %v662, 0
        %666 = vmatprep.subr.mxu0 0.0
        %667 = vmatpush1.msra.mxu0 %v282
        %668 = vmatprep.subr.mxu0 0.0
        %669 = vmatpush1.msra.mxu0 %v283
        %670 = vmatprep.subr.mxu0 0.0
        %671 = vmatpush1.msra.mxu0 %v284
        %672 = vmatprep.subr.mxu0 0.0
        %673 = vmatpush1.msra.mxu0 %v285
        %674 = vmatprep.subr.mxu0 0.0
        %675 = vmatpush1.msra.mxu0 0.0
        %676 = vmatprep.subr.mxu0 0.0
        %677 = vmatpush1.msra.mxu0 0.0
        %678 = vmatprep.subr.mxu0 0.0
        %679 = vmatpush1.msra.mxu0 0.0
        %680 = vmatprep.subr.mxu0 0.0
        %681 = vmatpush1.msra.mxu0 0.0
        %682 = vmatprep.subr.mxu0 0.0
        %683 = vmatpush1.msra.mxu0 0.0
        %684 = vmatprep.subr.mxu0 0.0
        %685 = vmatpush1.msra.mxu0 0.0
        %686 = vmatprep.subr.mxu0 0.0
        %687 = vmatpush1.msra.mxu0 0.0
        %688 = vmatprep.subr.mxu0 0.0
        %689 = vmatpush1.msra.mxu0 0.0
        %690 = vmatprep.subr.mxu0 0.0
        %691 = vmatpush1.msra.mxu0 0.0
        %692 = vmatprep.subr.mxu0 0.0
        %693 = vmatpush1.msra.mxu0 0.0
        %694 = vmatprep.subr.mxu0 0.0
        %695 = vmatpush1.msra.mxu0 0.0
        %696 = vmatprep.subr.mxu0 0.0
        %697 = vmatpush1.msra.mxu0 0.0
        %698 = vmatprep.subr.mxu0 0.0
        %699 = vmatpush1.msra.mxu0 0.0
        %700 = vmatprep.subr.mxu0 0.0
        %701 = vmatpush1.msra.mxu0 0.0
        %702 = vmatprep.subr.mxu0 0.0
        %703 = vmatpush1.msra.mxu0 0.0
        %704 = vmatprep.subr.mxu0 0.0
        %705 = vmatpush1.msra.mxu0 0.0
        %706 = vmatprep.subr.mxu0 0.0
        %707 = vmatpush1.msra.mxu0 0.0
        %708 = vmatprep.subr.mxu0 0.0
        %709 = vmatpush1.msra.mxu0 0.0
        %710 = vmatprep.subr.mxu0 0.0
        %711 = vmatpush1.msra.mxu0 0.0
        %712 = vmatprep.subr.mxu0 0.0
        %713 = vmatpush1.msra.mxu0 0.0
        %714 = vmatprep.subr.mxu0 0.0
        %715 = vmatpush1.msra.mxu0 0.0
        %716 = vmatprep.subr.mxu0 0.0
        %717 = vmatpush1.msra.mxu0 0.0
        %718 = vmatprep.subr.mxu0 0.0
        %719 = vmatpush1.msra.mxu0 0.0
        %720 = vmatprep.subr.mxu0 0.0
        %721 = vmatpush1.msra.mxu0 0.0
        %722 = vmatprep.subr.mxu0 0.0
        %723 = vmatpush1.msra.mxu0 0.0
        %724 = vmatprep.subr.mxu0 0.0
        %725 = vmatpush1.msra.mxu0 0.0
        %726 = vmatprep.subr.mxu0 0.0
        %727 = vmatpush1.msra.mxu0 0.0
        %728 = vmatprep.subr.mxu0 0.0
        %729 = vmatpush1.msra.mxu0 0.0
        %730 = vmatprep.mubr.f32.mxu0 0.0
        %731 = vmatmul.mubr.f32.gmra.mrb[0].mxu0 %v664
        %v732 = vpop.f32.mrb[0].mxu0
        %v733 = vadd.f32 0.0, %v732
        %v734 = vpop.f32.mrb[0].mxu0
        %735 = vdwg.mxu0
        %v736 = vadd.f32 %v418, %v733
        %v737 = vtanh.pop %v736
        %v739 = vsel %vm437, %v737, 0
        %741 = vmatprep.subr.mxu0 0.0
        %742 = vmatpush1.msra.mxu0 %v282
        %743 = vmatprep.subr.mxu0 0.0
        %744 = vmatpush1.msra.mxu0 %v283
        %745 = vmatprep.subr.mxu0 0.0
        %746 = vmatpush1.msra.mxu0 %v284
        %747 = vmatprep.subr.mxu0 0.0
        %748 = vmatpush1.msra.mxu0 %v285
        %749 = vmatprep.subr.mxu0 0.0
        %750 = vmatpush1.msra.mxu0 0.0
        %751 = vmatprep.subr.mxu0 0.0
        %752 = vmatpush1.msra.mxu0 0.0
        %753 = vmatprep.subr.mxu0 0.0
        %754 = vmatpush1.msra.mxu0 0.0
        %755 = vmatprep.subr.mxu0 0.0
        %756 = vmatpush1.msra.mxu0 0.0
        %757 = vmatprep.subr.mxu0 0.0
        %758 = vmatpush1.msra.mxu0 0.0
        %759 = vmatprep.subr.mxu0 0.0
        %760 = vmatpush1.msra.mxu0 0.0
        %761 = vmatprep.subr.mxu0 0.0
        %762 = vmatpush1.msra.mxu0 0.0
        %763 = vmatprep.subr.mxu0 0.0
        %764 = vmatpush1.msra.mxu0 0.0
        %765 = vmatprep.subr.mxu0 0.0
        %766 = vmatpush1.msra.mxu0 0.0
        %767 = vmatprep.subr.mxu0 0.0
        %768 = vmatpush1.msra.mxu0 0.0
        %769 = vmatprep.subr.mxu0 0.0
        %770 = vmatpush1.msra.mxu0 0.0
        %771 = vmatprep.subr.mxu0 0.0
        %772 = vmatpush1.msra.mxu0 0.0
        %773 = vmatprep.subr.mxu0 0.0
        %774 = vmatpush1.msra.mxu0 0.0
        %775 = vmatprep.subr.mxu0 0.0
        %776 = vmatpush1.msra.mxu0 0.0
        %777 = vmatprep.subr.mxu0 0.0
        %778 = vmatpush1.msra.mxu0 0.0
        %779 = vmatprep.subr.mxu0 0.0
        %780 = vmatpush1.msra.mxu0 0.0
        %781 = vmatprep.subr.mxu0 0.0
        %782 = vmatpush1.msra.mxu0 0.0
        %783 = vmatprep.subr.mxu0 0.0
        %784 = vmatpush1.msra.mxu0 0.0
        %785 = vmatprep.subr.mxu0 0.0
        %786 = vmatpush1.msra.mxu0 0.0
        %787 = vmatprep.subr.mxu0 0.0
        %788 = vmatpush1.msra.mxu0 0.0
        %789 = vmatprep.subr.mxu0 0.0
        %790 = vmatpush1.msra.mxu0 0.0
        %791 = vmatprep.subr.mxu0 0.0
        %792 = vmatpush1.msra.mxu0 0.0
        %793 = vmatprep.subr.mxu0 0.0
        %794 = vmatpush1.msra.mxu0 0.0
        %795 = vmatprep.subr.mxu0 0.0
        %796 = vmatpush1.msra.mxu0 0.0
        %797 = vmatprep.subr.mxu0 0.0
        %798 = vmatpush1.msra.mxu0 0.0
        %799 = vmatprep.subr.mxu0 0.0
        %800 = vmatpush1.msra.mxu0 0.0
        %801 = vmatprep.subr.mxu0 0.0
        %802 = vmatpush1.msra.mxu0 0.0
        %803 = vmatprep.subr.mxu0 0.0
        %804 = vmatpush1.msra.mxu0 0.0
        %805 = vmatprep.mubr.f32.mxu0 0.0
        %806 = vmatmul.mubr.f32.gmra.mrb[0].mxu0 %v739
        %v807 = vpop.f32.mrb[0].mxu0
        %v808 = vadd.f32 0.0, %v807
        %v809 = vpop.f32.mrb[0].mxu0
        %810 = vdwg.mxu0
        %v811 = vadd.f32 %v423, %v808
        %v812 = vtanh.pop %v811
        %v814 = vsel %vm437, %v812, 0
        %816 = vmatprep.subr.mxu0 0.0
        %817 = vmatpush1.msra.mxu0 %v282
        %818 = vmatprep.subr.mxu0 0.0
        %819 = vmatpush1.msra.mxu0 %v283
        %820 = vmatprep.subr.mxu0 0.0
        %821 = vmatpush1.msra.mxu0 %v284
        %822 = vmatprep.subr.mxu0 0.0
        %823 = vmatpush1.msra.mxu0 %v285
        %824 = vmatprep.subr.mxu0 0.0
        %825 = vmatpush1.msra.mxu0 0.0
        %826 = vmatprep.subr.mxu0 0.0
        %827 = vmatpush1.msra.mxu0 0.0
        %828 = vmatprep.subr.mxu0 0.0
        %829 = vmatpush1.msra.mxu0 0.0
        %830 = vmatprep.subr.mxu0 0.0
        %831 = vmatpush1.msra.mxu0 0.0
        %832 = vmatprep.subr.mxu0 0.0
        %833 = vmatpush1.msra.mxu0 0.0
        %834 = vmatprep.subr.mxu0 0.0
        %835 = vmatpush1.msra.mxu0 0.0
        %836 = vmatprep.subr.mxu0 0.0
        %837 = vmatpush1.msra.mxu0 0.0
        %838 = vmatprep.subr.mxu0 0.0
        %839 = vmatpush1.msra.mxu0 0.0
        %840 = vmatprep.subr.mxu0 0.0
        %841 = vmatpush1.msra.mxu0 0.0
        %842 = vmatprep.subr.mxu0 0.0
        %843 = vmatpush1.msra.mxu0 0.0
        %844 = vmatprep.subr.mxu0 0.0
        %845 = vmatpush1.msra.mxu0 0.0
        %846 = vmatprep.subr.mxu0 0.0
        %847 = vmatpush1.msra.mxu0 0.0
        %848 = vmatprep.subr.mxu0 0.0
        %849 = vmatpush1.msra.mxu0 0.0
        %850 = vmatprep.subr.mxu0 0.0
        %851 = vmatpush1.msra.mxu0 0.0
        %852 = vmatprep.subr.mxu0 0.0
        %853 = vmatpush1.msra.mxu0 0.0
        %854 = vmatprep.subr.mxu0 0.0
        %855 = vmatpush1.msra.mxu0 0.0
        %856 = vmatprep.subr.mxu0 0.0
        %857 = vmatpush1.msra.mxu0 0.0
        %858 = vmatprep.subr.mxu0 0.0
        %859 = vmatpush1.msra.mxu0 0.0
        %860 = vmatprep.subr.mxu0 0.0
        %861 = vmatpush1.msra.mxu0 0.0
        %862 = vmatprep.subr.mxu0 0.0
        %863 = vmatpush1.msra.mxu0 0.0
        %864 = vmatprep.subr.mxu0 0.0
        %865 = vmatpush1.msra.mxu0 0.0
        %866 = vmatprep.subr.mxu0 0.0
        %867 = vmatpush1.msra.mxu0 0.0
        %868 = vmatprep.subr.mxu0 0.0
        %869 = vmatpush1.msra.mxu0 0.0
        %870 = vmatprep.subr.mxu0 0.0
        %871 = vmatpush1.msra.mxu0 0.0
        %872 = vmatprep.subr.mxu0 0.0
        %873 = vmatpush1.msra.mxu0 0.0
        %874 = vmatprep.subr.mxu0 0.0
        %875 = vmatpush1.msra.mxu0 0.0
        %876 = vmatprep.subr.mxu0 0.0
        %877 = vmatpush1.msra.mxu0 0.0
        %878 = vmatprep.subr.mxu0 0.0
        %879 = vmatpush1.msra.mxu0 0.0
        %880 = vmatprep.mubr.f32.mxu0 0.0
        %881 = vmatmul.mubr.f32.gmra.mrb[0].mxu0 %v814
        %v882 = vpop.f32.mrb[0].mxu0
        %v883 = vadd.f32 0.0, %v882
        %v884 = vpop.f32.mrb[0].mxu0
        %885 = vdwg.mxu0
        %v886 = vadd.f32 %v428, %v883
        %v887 = vtanh.pop %v886
        %v889 = vsel %vm437, %v887, 0
        %891 = vmatprep.subr.mxu0 0.0
        %892 = vmatpush1.msra.mxu0 %v282
        %893 = vmatprep.subr.mxu0 0.0
        %894 = vmatpush1.msra.mxu0 %v283
        %895 = vmatprep.subr.mxu0 0.0
        %896 = vmatpush1.msra.mxu0 %v284
        %897 = vmatprep.subr.mxu0 0.0
        %898 = vmatpush1.msra.mxu0 %v285
        %899 = vmatprep.subr.mxu0 0.0
        %900 = vmatpush1.msra.mxu0 0.0
        %901 = vmatprep.subr.mxu0 0.0
        %902 = vmatpush1.msra.mxu0 0.0
        %903 = vmatprep.subr.mxu0 0.0
        %904 = vmatpush1.msra.mxu0 0.0
        %905 = vmatprep.subr.mxu0 0.0
        %906 = vmatpush1.msra.mxu0 0.0
        %907 = vmatprep.subr.mxu0 0.0
        %908 = vmatpush1.msra.mxu0 0.0
        %909 = vmatprep.subr.mxu0 0.0
        %910 = vmatpush1.msra.mxu0 0.0
        %911 = vmatprep.subr.mxu0 0.0
        %912 = vmatpush1.msra.mxu0 0.0
        %913 = vmatprep.subr.mxu0 0.0
        %914 = vmatpush1.msra.mxu0 0.0
        %915 = vmatprep.subr.mxu0 0.0
        %916 = vmatpush1.msra.mxu0 0.0
        %917 = vmatprep.subr.mxu0 0.0
        %918 = vmatpush1.msra.mxu0 0.0
        %919 = vmatprep.subr.mxu0 0.0
        %920 = vmatpush1.msra.mxu0 0.0
        %921 = vmatprep.subr.mxu0 0.0
        %922 = vmatpush1.msra.mxu0 0.0
        %923 = vmatprep.subr.mxu0 0.0
        %924 = vmatpush1.msra.mxu0 0.0
        %925 = vmatprep.subr.mxu0 0.0
        %926 = vmatpush1.msra.mxu0 0.0
        %927 = vmatprep.subr.mxu0 0.0
        %928 = vmatpush1.msra.mxu0 0.0
        %929 = vmatprep.subr.mxu0 0.0
        %930 = vmatpush1.msra.mxu0 0.0
        %931 = vmatprep.subr.mxu0 0.0
        %932 = vmatpush1.msra.mxu0 0.0
        %933 = vmatprep.subr.mxu0 0.0
        %934 = vmatpush1.msra.mxu0 0.0
        %935 = vmatprep.subr.mxu0 0.0
        %936 = vmatpush1.msra.mxu0 0.0
        %937 = vmatprep.subr.mxu0 0.0
        %938 = vmatpush1.msra.mxu0 0.0
        %939 = vmatprep.subr.mxu0 0.0
        %940 = vmatpush1.msra.mxu0 0.0
        %941 = vmatprep.subr.mxu0 0.0
        %942 = vmatpush1.msra.mxu0 0.0
        %943 = vmatprep.subr.mxu0 0.0
        %944 = vmatpush1.msra.mxu0 0.0
        %945 = vmatprep.subr.mxu0 0.0
        %946 = vmatpush1.msra.mxu0 0.0
        %947 = vmatprep.subr.mxu0 0.0
        %948 = vmatpush1.msra.mxu0 0.0
        %949 = vmatprep.subr.mxu0 0.0
        %950 = vmatpush1.msra.mxu0 0.0
        %951 = vmatprep.subr.mxu0 0.0
        %952 = vmatpush1.msra.mxu0 0.0
        %953 = vmatprep.subr.mxu0 0.0
        %954 = vmatpush1.msra.mxu0 0.0
        %955 = vmatprep.mubr.f32.mxu0 0.0
        %956 = vmatmul.mubr.f32.gmra.mrb[0].mxu0 %v889
        %v957 = vpop.f32.mrb[0].mxu0
        %v958 = vadd.f32 0.0, %v957
        %v959 = vpop.f32.mrb[0].mxu0
        %960 = vdwg.mxu0
        %v961 = vadd.f32 %v433, %v958
        %v962 = vtanh.pop %v961
        %v963 = vmax.f32 %v436, 0.0
        %v964 = vmax.f32 %v512, 0.0
        %v965 = vmax.f32 %v587, 0.0
        %v966 = vmax.f32 %v662, 0.0
        %v967 = vmax.f32 %v737, 0.0
        %v968 = vmax.f32 %v812, 0.0
        %v969 = vmax.f32 %v887, 0.0
        %v970 = vmax.f32 %v962, 0.0
        %v972 = vlaneseq
        %v973 = vshrl.u32 %v972, 7
        %v974 = vsub.s32 0, %v973
        %v975 = vrot.slane %v291, %v974
        %v978 = vsel %vm437, %v963, 0
        %v981 = vsel %vm437, %v964, 0
        %v984 = vsel %vm437, %v965, 0
        %v987 = vsel %vm437, %v966, 0
        %v990 = vsel %vm437, %v967, 0
        %v993 = vsel %vm437, %v968, 0
        %v996 = vsel %vm437, %v969, 0
        %v999 = vsel %vm437, %v970, 0
        %1001 = vmatprep.subr.mxu0 0.0
        %1002 = vmatpush1.msra.mxu0 %v287
        %1003 = vmatprep.subr.mxu0 0.0
        %1004 = vmatpush1.msra.mxu0 %v288
        %1005 = vmatprep.subr.mxu0 0.0
        %1006 = vmatpush1.msra.mxu0 %v289
        %1007 = vmatprep.subr.mxu0 0.0
        %1008 = vmatpush1.msra.mxu0 %v290
        %1009 = vmatprep.subr.mxu0 0.0
        %1010 = vmatpush1.msra.mxu0 0.0
        %1011 = vmatprep.subr.mxu0 0.0
        %1012 = vmatpush1.msra.mxu0 0.0
        %1013 = vmatprep.subr.mxu0 0.0
        %1014 = vmatpush1.msra.mxu0 0.0
        %1015 = vmatprep.subr.mxu0 0.0
        %1016 = vmatpush1.msra.mxu0 0.0
        %1017 = vmatprep.subr.mxu0 0.0
        %1018 = vmatpush1.msra.mxu0 0.0
        %1019 = vmatprep.subr.mxu0 0.0
        %1020 = vmatpush1.msra.mxu0 0.0
        %1021 = vmatprep.subr.mxu0 0.0
        %1022 = vmatpush1.msra.mxu0 0.0
        %1023 = vmatprep.subr.mxu0 0.0
        %1024 = vmatpush1.msra.mxu0 0.0
        %1025 = vmatprep.subr.mxu0 0.0
        %1026 = vmatpush1.msra.mxu0 0.0
        %1027 = vmatprep.subr.mxu0 0.0
        %1028 = vmatpush1.msra.mxu0 0.0
        %1029 = vmatprep.subr.mxu0 0.0
        %1030 = vmatpush1.msra.mxu0 0.0
        %1031 = vmatprep.subr.mxu0 0.0
        %1032 = vmatpush1.msra.mxu0 0.0
        %1033 = vmatprep.subr.mxu0 0.0
        %1034 = vmatpush1.msra.mxu0 0.0
        %1035 = vmatprep.subr.mxu0 0.0
        %1036 = vmatpush1.msra.mxu0 0.0
        %1037 = vmatprep.subr.mxu0 0.0
        %1038 = vmatpush1.msra.mxu0 0.0
        %1039 = vmatprep.subr.mxu0 0.0
        %1040 = vmatpush1.msra.mxu0 0.0
        %1041 = vmatprep.subr.mxu0 0.0
        %1042 = vmatpush1.msra.mxu0 0.0
        %1043 = vmatprep.subr.mxu0 0.0
        %1044 = vmatpush1.msra.mxu0 0.0
        %1045 = vmatprep.subr.mxu0 0.0
        %1046 = vmatpush1.msra.mxu0 0.0
        %1047 = vmatprep.subr.mxu0 0.0
        %1048 = vmatpush1.msra.mxu0 0.0
        %1049 = vmatprep.subr.mxu0 0.0
        %1050 = vmatpush1.msra.mxu0 0.0
        %1051 = vmatprep.subr.mxu0 0.0
        %1052 = vmatpush1.msra.mxu0 0.0
        %1053 = vmatprep.subr.mxu0 0.0
        %1054 = vmatpush1.msra.mxu0 0.0
        %1055 = vmatprep.subr.mxu0 0.0
        %1056 = vmatpush1.msra.mxu0 0.0
        %1057 = vmatprep.subr.mxu0 0.0
        %1058 = vmatpush1.msra.mxu0 0.0
        %1059 = vmatprep.subr.mxu0 0.0
        %1060 = vmatpush1.msra.mxu0 0.0
        %1061 = vmatprep.subr.mxu0 0.0
        %1062 = vmatpush1.msra.mxu0 0.0
        %1063 = vmatprep.subr.mxu0 0.0
        %1064 = vmatpush1.msra.mxu0 0.0
        %1065 = vmatprep.mubr.f32.mxu0 0.0
        %1066 = vmatmul.mubr.f32.gmra.mrb[0].mxu0 %v978
        %v1067 = vpop.f32.mrb[0].mxu0
        %v1068 = vadd.f32 %v975, %v1067
        %v1069 = vpop.f32.mrb[0].mxu0
        %1070 = vmatprep.mubr.f32.mxu0 0.0
        %1071 = vmatmul.mubr.f32.gmra.mrb[0].mxu0 %v981
        %v1072 = vpop.f32.mrb[0].mxu0
        %v1073 = vadd.f32 %v975, %v1072
        %v1074 = vpop.f32.mrb[0].mxu0
        %1075 = vmatprep.mubr.f32.mxu0 0.0
        %1076 = vmatmul.mubr.f32.gmra.mrb[0].mxu0 %v984
        %v1077 = vpop.f32.mrb[0].mxu0
        %v1078 = vadd.f32 %v975, %v1077
        %v1079 = vpop.f32.mrb[0].mxu0
        %1080 = vmatprep.mubr.f32.mxu0 0.0
        %1081 = vmatmul.mubr.f32.gmra.mrb[0].mxu0 %v987
        %v1082 = vpop.f32.mrb[0].mxu0
        %v1083 = vadd.f32 %v975, %v1082
        %v1084 = vpop.f32.mrb[0].mxu0
        %1085 = vmatprep.mubr.f32.mxu0 0.0
        %1086 = vmatmul.mubr.f32.gmra.mrb[0].mxu0 %v990
        %v1087 = vpop.f32.mrb[0].mxu0
        %v1088 = vadd.f32 %v975, %v1087
        %v1089 = vpop.f32.mrb[0].mxu0
        %1090 = vmatprep.mubr.f32.mxu0 0.0
        %1091 = vmatmul.mubr.f32.gmra.mrb[0].mxu0 %v993
        %v1092 = vpop.f32.mrb[0].mxu0
        %v1093 = vadd.f32 %v975, %v1092
        %v1094 = vpop.f32.mrb[0].mxu0
        %1095 = vmatprep.mubr.f32.mxu0 0.0
        %1096 = vmatmul.mubr.f32.gmra.mrb[0].mxu0 %v996
        %v1097 = vpop.f32.mrb[0].mxu0
        %v1098 = vadd.f32 %v975, %v1097
        %v1099 = vpop.f32.mrb[0].mxu0
        %1100 = vmatprep.mubr.f32.mxu0 0.0
        %1101 = vmatmul.mubr.f32.gmra.mrb[0].mxu0 %v999
        %v1102 = vpop.f32.mrb[0].mxu0
        %v1103 = vadd.f32 %v975, %v1102
        %v1104 = vpop.f32.mrb[0].mxu0
        %1105 = vdwg.mxu0
        %vm1106 = vcmask 64512
        %v1107 = vsel %vm1106, %v1068, -inf
        %1108 = vmax.xlane.f32.xlu0 %v1107
        %v1109 = vpop.xlane.xlu0 %1108
        %v1110 = vsel %vm1106, %v1073, -inf
        %1111 = vmax.xlane.f32.xlu0 %v1110
        %v1112 = vpop.xlane.xlu0 %1111
        %v1113 = vsel %vm1106, %v1078, -inf
        %1114 = vmax.xlane.f32.xlu0 %v1113
        %v1115 = vpop.xlane.xlu0 %1114
        %v1116 = vsel %vm1106, %v1083, -inf
        %1117 = vmax.xlane.f32.xlu0 %v1116
        %v1118 = vpop.xlane.xlu0 %1117
        %v1119 = vsel %vm1106, %v1088, -inf
        %1120 = vmax.xlane.f32.xlu0 %v1119
        %v1121 = vpop.xlane.xlu0 %1120
        %v1122 = vsel %vm1106, %v1093, -inf
        %1123 = vmax.xlane.f32.xlu0 %v1122
        %v1124 = vpop.xlane.xlu0 %1123
        %v1125 = vsel %vm1106, %v1098, -inf
        %1126 = vmax.xlane.f32.xlu0 %v1125
        %v1127 = vpop.xlane.xlu0 %1126
        %v1128 = vsel %vm1106, %v1103, -inf
        %1129 = vmax.xlane.f32.xlu0 %v1128
        %v1130 = vpop.xlane.xlu0 %1129
        %v1131 = vsub.f32 %v1068, %v1109
        %v1132 = vsub.f32 %v1073, %v1112
        %v1133 = vsub.f32 %v1078, %v1115
        %v1134 = vsub.f32 %v1083, %v1118
        %v1135 = vsub.f32 %v1088, %v1121
        %v1136 = vsub.f32 %v1093, %v1124
        %v1137 = vsub.f32 %v1098, %v1127
        %v1138 = vsub.f32 %v1103, %v1130
        %v1139 = vmul.f32 %v1131, 1.442695
        %v1140 = vpow.pop %v1139
        %v1141 = vmul.f32 %v1132, 1.442695
        %v1142 = vpow.pop %v1141
        %v1143 = vmul.f32 %v1133, 1.442695
        %v1144 = vpow.pop %v1143
        %v1145 = vmul.f32 %v1134, 1.442695
        %v1146 = vpow.pop %v1145
        %v1147 = vmul.f32 %v1135, 1.442695
        %v1148 = vpow.pop %v1147
        %v1149 = vmul.f32 %v1136, 1.442695
        %v1150 = vpow.pop %v1149
        %v1151 = vmul.f32 %v1137, 1.442695
        %v1152 = vpow.pop %v1151
        %v1153 = vmul.f32 %v1138, 1.442695
        %v1154 = vpow.pop %v1153
        %v1155 = vsel %vm1106, %v1140, 0.0
        %1156 = vadd.xlane.f32.xlu0 %v1155
        %v1157 = vpop.xlane.xlu0 %1156
        %v1158 = vsel %vm1106, %v1142, 0.0
        %1159 = vadd.xlane.f32.xlu0 %v1158
        %v1160 = vpop.xlane.xlu0 %1159
        %v1161 = vsel %vm1106, %v1144, 0.0
        %1162 = vadd.xlane.f32.xlu0 %v1161
        %v1163 = vpop.xlane.xlu0 %1162
        %v1164 = vsel %vm1106, %v1146, 0.0
        %1165 = vadd.xlane.f32.xlu0 %v1164
        %v1166 = vpop.xlane.xlu0 %1165
        %v1167 = vsel %vm1106, %v1148, 0.0
        %1168 = vadd.xlane.f32.xlu0 %v1167
        %v1169 = vpop.xlane.xlu0 %1168
        %v1170 = vsel %vm1106, %v1150, 0.0
        %1171 = vadd.xlane.f32.xlu0 %v1170
        %v1172 = vpop.xlane.xlu0 %1171
        %v1173 = vsel %vm1106, %v1152, 0.0
        %1174 = vadd.xlane.f32.xlu0 %v1173
        %v1175 = vpop.xlane.xlu0 %1174
        %v1176 = vsel %vm1106, %v1154, 0.0
        %1177 = vadd.xlane.f32.xlu0 %v1176
        %v1178 = vpop.xlane.xlu0 %1177
        %v1179 = vlog2.pop %v1157
        %v1180 = vmul.f32 %v1179, 0.6931472
        %v1181 = vlog2.pop %v1160
        %v1182 = vmul.f32 %v1181, 0.6931472
        %v1183 = vlog2.pop %v1163
        %v1184 = vmul.f32 %v1183, 0.6931472
        %v1185 = vlog2.pop %v1166
        %v1186 = vmul.f32 %v1185, 0.6931472
        %v1187 = vlog2.pop %v1169
        %v1188 = vmul.f32 %v1187, 0.6931472
        %v1189 = vlog2.pop %v1172
        %v1190 = vmul.f32 %v1189, 0.6931472
        %v1191 = vlog2.pop %v1175
        %v1192 = vmul.f32 %v1191, 0.6931472
        %v1193 = vlog2.pop %v1178
        %v1194 = vmul.f32 %v1193, 0.6931472
        %v1195 = vsub.f32 %v1131, %v1180
        %v1196 = vsub.f32 %v1132, %v1182
        %v1197 = vsub.f32 %v1133, %v1184
        %v1198 = vsub.f32 %v1134, %v1186
        %v1199 = vsub.f32 %v1135, %v1188
        %v1200 = vsub.f32 %v1136, %v1190
        %v1201 = vsub.f32 %v1137, %v1192
        %v1202 = vsub.f32 %v1138, %v1194
        %1203 = vst.msk [vmem:[%s279] sm:$0xff] %vm1106, %v1195
        %1204 = vst.msk [vmem:[%s279 + $0x8] sm:$0xff] %vm1106, %v1196
        %1205 = vst.msk [vmem:[%s279 + $0x10] sm:$0xff] %vm1106, %v1197
        %1206 = vst.msk [vmem:[%s279 + $0x18] sm:$0xff] %vm1106, %v1198
        %1207 = vst.msk [vmem:[%s279 + $0x20] sm:$0xff] %vm1106, %v1199
        %1208 = vst.msk [vmem:[%s279 + $0x28] sm:$0xff] %vm1106, %v1200
        %1209 = vst.msk [vmem:[%s279 + $0x30] sm:$0xff] %vm1106, %v1201
        %1210 = vst.msk [vmem:[%s279 + $0x38] sm:$0xff] %vm1106, %v1202
        %s1211 = sand.u32 %s160, 1
        %s1212 = sand.u32 %s160, 1
        %s1213 = smul.addr %s1212, 64
        %s1214 = scalar_lea.vmem [#allocation6], %s1213
        // Predicated region
        $region53: #{tpu_custom_call.1} parent=43 // pred_check
          %p1215 = pneg %p170
        $region54: #{tpu_custom_call.1} parent=43 // pred_check_branch
          %1217 = sbr.rel (%p1215) target = $region56
        $region55: #{tpu_custom_call.1} parent=43 // pred_region
          %s1218 = smul.addr %s21, 8
          %s1219 = scalar_lea.vmem %s6, %s1218
          // Predicated region
          $region57: #{tpu_custom_call.1} parent=55 // pred_check
            _
          $region58: #{tpu_custom_call.1} parent=55 // pred_check_branch
            %1221 = sbr.rel (0) target = $region60
          $region59: #{tpu_custom_call.1} parent=55 // pred_region
            // Predicated region
            $region61: #{tpu_custom_call.1} parent=59 // pred_check
              _
            $region62: #{tpu_custom_call.1} parent=59 // pred_check_branch
              %1223 = sbr.rel (0) target = $region64
            $region63: #{tpu_custom_call.1} parent=59 // pred_region
              // Predicated region
              $region76: #{tpu_custom_call.1} parent=63 // pred_check
                _
              $region77: #{tpu_custom_call.1} parent=63 // pred_check_branch
                %1252 = sbr.rel (0) target = $region79
              $region78: #{tpu_custom_call.1} parent=63 // pred_region
                loop: start=0, step=1, limit=1
                $region80: #{tpu_custom_call.1} parent=78 // loop_pre_header
                  _
                $region81: #{tpu_custom_call.1} parent=78 // loop_header
                  %s1254 = sphi 0, %s1258
                  %p1255 = scmp.ge.s32.totalorder %s1254, 1
                  %s1259 = sphi %s1214, %s1214
                  %s1260 = sphi %s1219, %s1219
                $region82: #{tpu_custom_call.1} parent=78 // loop_header_branch
                  %1257 = sbr.rel (%p1255) target = $region86
                $region83: #{tpu_custom_call.1} parent=78 // loop_body
                  %v1261 = vld [vmem:[%s1259] sm:$0xff]
                  %1262 = vst [vmem:[%s1260] sm:$0xff] %v1261
                  %v1263 = vld [vmem:[%s1259 + $0x8] sm:$0xff]
                  %1264 = vst [vmem:[%s1260 + $0x10] sm:$0xff] %v1263
                  %v1265 = vld [vmem:[%s1259 + $0x10] sm:$0xff]
                  %1266 = vst [vmem:[%s1260 + $0x20] sm:$0xff] %v1265
                  %v1267 = vld [vmem:[%s1259 + $0x18] sm:$0xff]
                  %1268 = vst [vmem:[%s1260 + $0x30] sm:$0xff] %v1267
                  %v1269 = vld [vmem:[%s1259 + $0x20] sm:$0xff]
                  %1270 = vst [vmem:[%s1260 + $0x40] sm:$0xff] %v1269
                  %v1271 = vld [vmem:[%s1259 + $0x28] sm:$0xff]
                  %1272 = vst [vmem:[%s1260 + $0x50] sm:$0xff] %v1271
                  %v1273 = vld [vmem:[%s1259 + $0x30] sm:$0xff]
                  %1274 = vst [vmem:[%s1260 + $0x60] sm:$0xff] %v1273
                  %v1275 = vld [vmem:[%s1259 + $0x38] sm:$0xff]
                  %1276 = vst [vmem:[%s1260 + $0x70] sm:$0xff] %v1275
                $region84: #{tpu_custom_call.1} parent=78 // loop_footer
                  %s1258 = sadd.s32 1, %s1254
                $region85: #{tpu_custom_call.1} parent=78 // loop_footer_branch
                  %1253 = sbr.rel target = $region81
                $region86: #{tpu_custom_call.1} parent=78 // loop_exit
                  _
              $region79: #{tpu_custom_call.1} parent=63 // pred_fallthru
                _
              // Predicated region
              $region87: #{tpu_custom_call.1} parent=63 // pred_check
                _
              $region88: #{tpu_custom_call.1} parent=63 // pred_check_branch
                %1278 = sbr.rel target = $region90
              $region89: #{tpu_custom_call.1} parent=63 // pred_region
                _
              $region90: #{tpu_custom_call.1} parent=63 // pred_fallthru
                _
            $region64: #{tpu_custom_call.1} parent=59 // pred_fallthru
              _
            // Predicated region
            $region65: #{tpu_custom_call.1} parent=59 // pred_check
              _
            $region66: #{tpu_custom_call.1} parent=59 // pred_check_branch
              %1225 = sbr.rel target = $region68
            $region67: #{tpu_custom_call.1} parent=59 // pred_region
              loop: start=0, step=1, limit=1
              $region69: #{tpu_custom_call.1} parent=67 // loop_pre_header
                _
              $region70: #{tpu_custom_call.1} parent=67 // loop_header
                %s1228 = sphi 0, %s1232
                %p1229 = scmp.ge.s32.totalorder %s1228, 1
                %s1233 = sphi %s1214, %s1214
                %s1234 = sphi %s1219, %s1219
              $region71: #{tpu_custom_call.1} parent=67 // loop_header_branch
                %1231 = sbr.rel (%p1229) target = $region75
              $region72: #{tpu_custom_call.1} parent=67 // loop_body
                %v1235 = vld [vmem:[%s1233] sm:$0xff]
                %1236 = vst [vmem:[%s1234] sm:$0xff] %v1235
                %v1237 = vld [vmem:[%s1233 + $0x8] sm:$0xff]
                %1238 = vst [vmem:[%s1234 + $0x10] sm:$0xff] %v1237
                %v1239 = vld [vmem:[%s1233 + $0x10] sm:$0xff]
                %1240 = vst [vmem:[%s1234 + $0x20] sm:$0xff] %v1239
                %v1241 = vld [vmem:[%s1233 + $0x18] sm:$0xff]
                %1242 = vst [vmem:[%s1234 + $0x30] sm:$0xff] %v1241
                %v1243 = vld [vmem:[%s1233 + $0x20] sm:$0xff]
                %1244 = vst [vmem:[%s1234 + $0x40] sm:$0xff] %v1243
                %v1245 = vld [vmem:[%s1233 + $0x28] sm:$0xff]
                %1246 = vst [vmem:[%s1234 + $0x50] sm:$0xff] %v1245
                %v1247 = vld [vmem:[%s1233 + $0x30] sm:$0xff]
                %1248 = vst [vmem:[%s1234 + $0x60] sm:$0xff] %v1247
                %v1249 = vld [vmem:[%s1233 + $0x38] sm:$0xff]
                %1250 = vst [vmem:[%s1234 + $0x70] sm:$0xff] %v1249
              $region73: #{tpu_custom_call.1} parent=67 // loop_footer
                %s1232 = sadd.s32 1, %s1228
              $region74: #{tpu_custom_call.1} parent=67 // loop_footer_branch
                %1227 = sbr.rel target = $region70
              $region75: #{tpu_custom_call.1} parent=67 // loop_exit
                _
            $region68: #{tpu_custom_call.1} parent=59 // pred_fallthru
              _
          $region60: #{tpu_custom_call.1} parent=55 // pred_fallthru
            _
          %1279 = vnop
        $region56: #{tpu_custom_call.1} parent=43 // pred_fallthru
          _
      $region44: #{tpu_custom_call.1} parent=5 // pred_fallthru
        _
      %p1280 = scmp.le.s32.totalorder 2, %s16
      // Predicated region
      $region91: #{tpu_custom_call.1} parent=5 // pred_check
        %p1281 = pneg %p1280
      $region92: #{tpu_custom_call.1} parent=5 // pred_check_branch
        %1283 = sbr.rel (%p1281) target = $region94
      $region93: #{tpu_custom_call.1} parent=5 // pred_region
        %s1284 = ssub.s32 %s16, 2
        // Predicated region
        $region95: #{tpu_custom_call.1} parent=93 // pred_check
          %p1285 = pneg %p176
        $region96: #{tpu_custom_call.1} parent=93 // pred_check_branch
          %1287 = sbr.rel (%p1285) target = $region98
        $region97: #{tpu_custom_call.1} parent=93 // pred_region
          %s1288 = sand.u32 %s161, 1
          %s1289 = sand.u32 %s161, 1
          %s1290 = smul.addr %s1289, 64
          %s1291 = scalar_lea.vmem [#allocation6], %s1290
        $region98: #{tpu_custom_call.1} parent=93 // pred_fallthru
          _
      $region94: #{tpu_custom_call.1} parent=5 // pred_fallthru
        _
    $region6: #{tpu_custom_call.1} parent=1 // loop_footer
      %s20 = sadd.s32 1, %s16
    $region7: #{tpu_custom_call.1} parent=1 // loop_footer_branch
      %15 = sbr.rel target = $region3
    $region8: #{tpu_custom_call.1} parent=1 // loop_exit
      _
    %1292 = vsyncpa [#allocation3], 1
    %s1293 = scalar_lea.sflag [#allocation3], 1
    %1294 = vsyncpa %s1293, 1
    %1295 = vsyncpa [#allocation5], 1

</llo_original>
